<compile_context>
chip_gen: v7x
topology: tpu7x:2x2x1
jax: 0.10.0
libtpu: 0.0.40
codegen_flags: <defaults>
</compile_context>

<pallas_src>
import functools

import jax
import jax.numpy as jnp
from jax.experimental import pallas as pl
from jax.experimental.pallas import tpu as pltpu

BN_EPS = 1e-5


def dense_block_kernel(x_ref, w_ref, t_ref, o_ref, state_ref, *,
                       nin, nout, cout_max):
    """One grid step: a (tile_p)-wide slab of pixels through all 5 layers.

    x_ref:     (nin, tile_p)            compute dtype (bf16 or f32)
    w_ref:     (5*cout_max, 4*nin)      packed, BN-scale-folded W^T slabs
    t_ref:     (cout_max, 5)            per-channel shifts, column l = layer l
    o_ref:     (nout, tile_p)           f32, lane-dense output block
    state_ref: (4*nin, tile_p) f32 VMEM scratch, rows = [o2, o1, o3, o4]
    """
    cdt = w_ref.dtype

    def layer(l, cout, cin, inp):
        # inp: (cin, tile_p) in compute dtype.
        w = w_ref[l * cout_max:l * cout_max + cout, :cin]        # (cout, cin)
        y = jnp.dot(w, inp, preferred_element_type=jnp.float32)  # (cout, tile_p)
        t = t_ref[:cout, l:l + 1]                                # (cout, 1) f32
        return jnp.maximum(y + t, 0.0)                           # BN+bias+ReLU

    x = x_ref[...]                                          # (nin, tile_p)
    o1 = layer(0, nin, nin, x)                               # conv1(x)
    o2 = layer(1, nin, nin, o1.astype(cdt))                  # conv2(o1)

    # cat order in the module: [o2, o1, o3, o4] -> growing prefix of state.
    state_ref[0:nin, :] = o2
    state_ref[nin:2 * nin, :] = o1
    o3 = layer(2, nin, 2 * nin, state_ref[0:2 * nin, :].astype(cdt))
    state_ref[2 * nin:3 * nin, :] = o3
    o4 = layer(3, nin, 3 * nin, state_ref[0:3 * nin, :].astype(cdt))
    state_ref[3 * nin:4 * nin, :] = o4
    o5 = layer(4, nout, 4 * nin, state_ref[0:4 * nin, :].astype(cdt))

    o_ref[...] = o5.astype(o_ref.dtype)


def _pick_tile_p(p, max_tile_p=1024):
    """Largest multiple-of-128 divisor of p <= max_tile_p, preferring grid>=2."""
    assert p % 128 == 0, "N*H*W must be a multiple of 128"
    cap = min(p, max_tile_p)
    best = cap if p % cap == 0 else 128
    for cand in range(128, cap + 1, 128):
        if p % cand == 0 and p // cand >= 2:
            best = cand
    return best


def make_stdconv_params(key, cin, cout):
    """Deterministic synthetic parameters for one StdConv (1x1 conv + BN)."""
    kw, kb, kg, kbt, km, kv = jax.random.split(key, 6)
    w = 0.1 * jax.random.normal(kw, (cin, cout), jnp.float32)      # (Cin,Cout)
    b = 0.1 * jax.random.normal(kb, (cout,), jnp.float32)          # conv bias
    gamma = 1.0 + 0.1 * jax.random.normal(kg, (cout,), jnp.float32)
    beta = 0.1 * jax.random.normal(kbt, (cout,), jnp.float32)
    r_mean = 0.1 * jax.random.normal(km, (cout,), jnp.float32)
    r_var = 0.5 + 0.1 * jnp.abs(jax.random.normal(kv, (cout,), jnp.float32))
    return dict(w=w, b=b, gamma=gamma, beta=beta, mean=r_mean, var=r_var)


def _fold_layer(p):
    """Fold eval-mode BN + conv bias: returns (scale-folded W^T, shift)."""
    scale = p["gamma"] / jnp.sqrt(p["var"] + BN_EPS)                 # (cout,)
    shift = (p["b"] - p["mean"]) * scale + p["beta"]                 # (cout,)
    wt = p["w"].T * scale[:, None]                                   # (cout, cin)
    return wt, shift


def dense_block_pallas(x_nchw, params, *, tile_p=None,
                       compute_dtype=jnp.bfloat16):
    """x_nchw: (N, nin, H, W) f32  ->  (N, nout, H, W) f32 (eval-mode DenseBlock)."""
    n, nin, h, w = x_nchw.shape
    nout = params["c5"]["w"].shape[1]
    cout_max = max(nin, nout)
    p = n * h * w
    if tile_p is None:
        tile_p = _pick_tile_p(p)
    assert tile_p % 128 == 0 and p % tile_p == 0

    # NCHW -> (C, P): channels on sublanes, flattened (n,h,w) pixels on lanes.
    x_cp = jnp.transpose(x_nchw, (1, 0, 2, 3)).reshape(nin, p).astype(compute_dtype)

    # Consolidate all per-layer params into 2 arrays (wrapper glue, tiny).
    layers = [("c1", nin, nin), ("c2", nin, nin), ("c3", 2 * nin, nin),
              ("c4", 3 * nin, nin), ("c5", 4 * nin, nout)]
    w_packed = jnp.zeros((5 * cout_max, 4 * nin), jnp.float32)
    shifts = jnp.zeros((cout_max, 5), jnp.float32)
    for l, (name, cin, cout) in enumerate(layers):
        wt, shift = _fold_layer(params[name])
        w_packed = w_packed.at[l * cout_max:l * cout_max + cout, :cin].set(wt)
        shifts = shifts.at[:cout, l].set(shift)
    w_packed = w_packed.astype(compute_dtype)

    kernel = functools.partial(dense_block_kernel, nin=nin, nout=nout,
                               cout_max=cout_max)

    out_cp = pl.pallas_call(
        kernel,
        out_shape=jax.ShapeDtypeStruct((nout, p), jnp.float32),
        grid_spec=pltpu.PrefetchScalarGridSpec(
            num_scalar_prefetch=0,
            grid=(p // tile_p,),
            in_specs=[
                pl.BlockSpec((nin, tile_p), lambda i: (0, i)),       # x slab
                pl.BlockSpec(w_packed.shape, lambda i: (0, 0)),      # weights
                pl.BlockSpec(shifts.shape, lambda i: (0, 0)),        # shifts
            ],
            out_specs=pl.BlockSpec((nout, tile_p), lambda i: (0, i)),
            scratch_shapes=[pltpu.VMEM((4 * nin, tile_p), jnp.float32)],
        ),
        compiler_params=pltpu.CompilerParams(
            dimension_semantics=("parallel",),
            vmem_limit_bytes=32 * 1024 * 1024,
        ),
    )(x_cp, w_packed, shifts)

    # (nout, P) -> NCHW.
    return jnp.transpose(out_cp.reshape(nout, n, h, w), (1, 0, 2, 3))


def dense_block_ref(x_nchw, params):
    """Pure-JAX f32 reference (unfused math) for validation."""
    n, nin, h, w = x_nchw.shape
    x = jnp.transpose(x_nchw, (0, 2, 3, 1)).reshape(-1, nin)

    def stdconv(xin, p):
        y = xin @ p["w"] + p["b"]
        y = (y - p["mean"]) / jnp.sqrt(p["var"] + BN_EPS) * p["gamma"] + p["beta"]
        return jnp.maximum(y, 0.0)  # dropout = identity (eval)

    o1 = stdconv(x, params["c1"])
    o2 = stdconv(o1, params["c2"])
    o2c = jnp.concatenate([o2, o1], axis=-1)
    o3 = stdconv(o2c, params["c3"])
    o3c = jnp.concatenate([o2c, o3], axis=-1)
    o4 = stdconv(o3c, params["c4"])
    o4c = jnp.concatenate([o3c, o4], axis=-1)
    o5 = stdconv(o4c, params["c5"])
    nout = o5.shape[-1]
    return jnp.transpose(o5.reshape(n, h, w, nout), (0, 3, 1, 2))


if __name__ == "__main__":
    nin, nout = 4, 8
    n, h, w = 2, 16, 16

    key = jax.random.PRNGKey(0)
    kx, k1, k2, k3, k4, k5 = jax.random.split(key, 6)

    x = jax.random.normal(kx, (n, nin, h, w), jnp.float32)
    params = {
        "c1": make_stdconv_params(k1, nin, nin),
        "c2": make_stdconv_params(k2, nin, nin),
        "c3": make_stdconv_params(k3, 2 * nin, nin),
        "c4": make_stdconv_params(k4, 3 * nin, nin),
        "c5": make_stdconv_params(k5, 4 * nin, nout),
    }

    out = jax.block_until_ready(dense_block_pallas(x, params))
    ref = jax.block_until_ready(dense_block_ref(x, params))

    assert out.shape == (n, nout, h, w), out.shape
    max_err = float(jnp.max(jnp.abs(out - ref)))
    # bf16 input/weight quantization (f32 accumulation) -> loose-ish tolerance.
    assert jnp.allclose(out, ref, rtol=3e-2, atol=3e-2), max_err

    print("KERNEL_OK")
</pallas_src>

<mosaic_0001>
module attributes {stable_mosaic.version = 11 : i64} {
  func.func @dense_block_kernel(%arg0: i32, %arg1: memref<4x256xbf16, #tpu.memory_space<vmem>>, %arg2: memref<40x16xbf16, #tpu.memory_space<vmem>>, %arg3: memref<8x5xf32, #tpu.memory_space<vmem>>, %arg4: memref<8x256xf32, #tpu.memory_space<vmem>>, %arg5: memref<16x256xf32, #tpu.memory_space<vmem>>) attributes {dimension_semantics = [#tpu.dimension_semantics<parallel>], iteration_bounds = array<i64: 2>, scalar_prefetch = 0 : i64, scratch_operands = 1 : i64, tpu.core_type = #tpu.core_type<tc>, window_params = [{transform_indices = @transform_0, window_bounds = array<i64: 4, 256>}, {pipeline_mode = #tpu.pipeline_mode<synchronous>, transform_indices = @transform_1, window_bounds = array<i64: 40, 16>}, {pipeline_mode = #tpu.pipeline_mode<synchronous>, transform_indices = @transform_2, window_bounds = array<i64: 8, 5>}, {transform_indices = @transform_3, window_bounds = array<i64: 8, 256>}]} {
    %c0 = arith.constant 0 : index
    %c0_0 = arith.constant 0 : index
    %0 = vector.load %arg1[%c0, %c0_0] : memref<4x256xbf16, #tpu.memory_space<vmem>>, vector<4x256xbf16>
    %c0_1 = arith.constant 0 : index
    %c0_2 = arith.constant 0 : index
    %1 = vector.load %arg2[%c0_1, %c0_2] : memref<40x16xbf16, #tpu.memory_space<vmem>>, vector<4x4xbf16>
    %cst = arith.constant dense<0.000000e+00> : vector<4x256xf32>
    %2 = tpu.matmul %1, %0, %cst {dimension_numbers = #tpu.dot_dimension_numbers<[1], [0], [0], [1], [0, 0, 1, 1], [], []>} : vector<4x4xbf16>, vector<4x256xbf16>, vector<4x256xf32> -> vector<4x256xf32>
    %c0_3 = arith.constant 0 : index
    %c0_4 = arith.constant 0 : index
    %3 = vector.load %arg3[%c0_3, %c0_4] : memref<8x5xf32, #tpu.memory_space<vmem>>, vector<4x1xf32>
    %4 = vector.broadcast %3 : vector<4x1xf32> to vector<4x256xf32>
    %5 = arith.addf %2, %4 : vector<4x256xf32>
    %cst_5 = arith.constant 0.000000e+00 : f32
    %6 = vector.broadcast %cst_5 : f32 to vector<4x256xf32>
    %7 = arith.maximumf %5, %6 : vector<4x256xf32>
    %8 = arith.truncf %7 : vector<4x256xf32> to vector<4x256xbf16>
    %c8 = arith.constant 8 : index
    %c0_6 = arith.constant 0 : index
    %9 = vector.load %arg2[%c8, %c0_6] : memref<40x16xbf16, #tpu.memory_space<vmem>>, vector<4x4xbf16>
    %cst_7 = arith.constant dense<0.000000e+00> : vector<4x256xf32>
    %10 = tpu.matmul %9, %8, %cst_7 {dimension_numbers = #tpu.dot_dimension_numbers<[1], [0], [0], [1], [0, 0, 1, 1], [], []>} : vector<4x4xbf16>, vector<4x256xbf16>, vector<4x256xf32> -> vector<4x256xf32>
    %c0_8 = arith.constant 0 : index
    %c1 = arith.constant 1 : index
    %11 = vector.load %arg3[%c0_8, %c1] : memref<8x5xf32, #tpu.memory_space<vmem>>, vector<4x1xf32>
    %12 = vector.broadcast %11 : vector<4x1xf32> to vector<4x256xf32>
    %13 = arith.addf %10, %12 : vector<4x256xf32>
    %cst_9 = arith.constant 0.000000e+00 : f32
    %14 = vector.broadcast %cst_9 : f32 to vector<4x256xf32>
    %15 = arith.maximumf %13, %14 : vector<4x256xf32>
    %c0_10 = arith.constant 0 : index
    %c0_11 = arith.constant 0 : index
    %16 = vector.load %arg5[%c0_10, %c0_11] : memref<16x256xf32, #tpu.memory_space<vmem>>, vector<4x256xf32>
    tpu.vector_store %arg5[%c0_10, %c0_11], %15 {strides = array<i32>} : memref<16x256xf32, #tpu.memory_space<vmem>>, vector<4x256xf32>,
    %c4 = arith.constant 4 : index
    %c0_12 = arith.constant 0 : index
    %17 = vector.load %arg5[%c4, %c0_12] : memref<16x256xf32, #tpu.memory_space<vmem>>, vector<4x256xf32>
    tpu.vector_store %arg5[%c4, %c0_12], %7 {strides = array<i32>} : memref<16x256xf32, #tpu.memory_space<vmem>>, vector<4x256xf32>,
    %c0_13 = arith.constant 0 : index
    %c0_14 = arith.constant 0 : index
    %18 = vector.load %arg5[%c0_13, %c0_14] : memref<16x256xf32, #tpu.memory_space<vmem>>, vector<8x256xf32>
    %19 = arith.truncf %18 : vector<8x256xf32> to vector<8x256xbf16>
    %c16 = arith.constant 16 : index
    %c0_15 = arith.constant 0 : index
    %20 = vector.load %arg2[%c16, %c0_15] : memref<40x16xbf16, #tpu.memory_space<vmem>>, vector<4x8xbf16>
    %cst_16 = arith.constant dense<0.000000e+00> : vector<4x256xf32>
    %21 = tpu.matmul %20, %19, %cst_16 {dimension_numbers = #tpu.dot_dimension_numbers<[1], [0], [0], [1], [0, 0, 1, 1], [], []>} : vector<4x8xbf16>, vector<8x256xbf16>, vector<4x256xf32> -> vector<4x256xf32>
    %c0_17 = arith.constant 0 : index
    %c2 = arith.constant 2 : index
    %22 = vector.load %arg3[%c0_17, %c2] : memref<8x5xf32, #tpu.memory_space<vmem>>, vector<4x1xf32>
    %23 = vector.broadcast %22 : vector<4x1xf32> to vector<4x256xf32>
    %24 = arith.addf %21, %23 : vector<4x256xf32>
    %cst_18 = arith.constant 0.000000e+00 : f32
    %25 = vector.broadcast %cst_18 : f32 to vector<4x256xf32>
    %26 = arith.maximumf %24, %25 : vector<4x256xf32>
    %c8_19 = arith.constant 8 : index
    %c0_20 = arith.constant 0 : index
    %27 = vector.load %arg5[%c8_19, %c0_20] : memref<16x256xf32, #tpu.memory_space<vmem>>, vector<4x256xf32>
    tpu.vector_store %arg5[%c8_19, %c0_20], %26 {strides = array<i32>} : memref<16x256xf32, #tpu.memory_space<vmem>>, vector<4x256xf32>,
    %c0_21 = arith.constant 0 : index
    %c0_22 = arith.constant 0 : index
    %28 = vector.load %arg5[%c0_21, %c0_22] : memref<16x256xf32, #tpu.memory_space<vmem>>, vector<12x256xf32>
    %29 = arith.truncf %28 : vector<12x256xf32> to vector<12x256xbf16>
    %c24 = arith.constant 24 : index
    %c0_23 = arith.constant 0 : index
    %30 = vector.load %arg2[%c24, %c0_23] : memref<40x16xbf16, #tpu.memory_space<vmem>>, vector<4x12xbf16>
    %cst_24 = arith.constant dense<0.000000e+00> : vector<4x256xf32>
    %31 = tpu.matmul %30, %29, %cst_24 {dimension_numbers = #tpu.dot_dimension_numbers<[1], [0], [0], [1], [0, 0, 1, 1], [], []>} : vector<4x12xbf16>, vector<12x256xbf16>, vector<4x256xf32> -> vector<4x256xf32>
    %c0_25 = arith.constant 0 : index
    %c3 = arith.constant 3 : index
    %32 = vector.load %arg3[%c0_25, %c3] : memref<8x5xf32, #tpu.memory_space<vmem>>, vector<4x1xf32>
    %33 = vector.broadcast %32 : vector<4x1xf32> to vector<4x256xf32>
    %34 = arith.addf %31, %33 : vector<4x256xf32>
    %cst_26 = arith.constant 0.000000e+00 : f32
    %35 = vector.broadcast %cst_26 : f32 to vector<4x256xf32>
    %36 = arith.maximumf %34, %35 : vector<4x256xf32>
    %c12 = arith.constant 12 : index
    %c0_27 = arith.constant 0 : index
    %37 = vector.load %arg5[%c12, %c0_27] : memref<16x256xf32, #tpu.memory_space<vmem>>, vector<4x256xf32>
    tpu.vector_store %arg5[%c12, %c0_27], %36 {strides = array<i32>} : memref<16x256xf32, #tpu.memory_space<vmem>>, vector<4x256xf32>,
    %c0_28 = arith.constant 0 : index
    %c0_29 = arith.constant 0 : index
    %38 = vector.load %arg5[%c0_28, %c0_29] : memref<16x256xf32, #tpu.memory_space<vmem>>, vector<16x256xf32>
    %39 = arith.truncf %38 : vector<16x256xf32> to vector<16x256xbf16>
    %c32 = arith.constant 32 : index
    %c0_30 = arith.constant 0 : index
    %40 = vector.load %arg2[%c32, %c0_30] : memref<40x16xbf16, #tpu.memory_space<vmem>>, vector<8x16xbf16>
    %cst_31 = arith.constant dense<0.000000e+00> : vector<8x256xf32>
    %41 = tpu.matmul %40, %39, %cst_31 {dimension_numbers = #tpu.dot_dimension_numbers<[1], [0], [0], [1], [0, 0, 1, 1], [], []>} : vector<8x16xbf16>, vector<16x256xbf16>, vector<8x256xf32> -> vector<8x256xf32>
    %c0_32 = arith.constant 0 : index
    %c4_33 = arith.constant 4 : index
    %42 = vector.load %arg3[%c0_32, %c4_33] : memref<8x5xf32, #tpu.memory_space<vmem>>, vector<8x1xf32>
    %43 = vector.broadcast %42 : vector<8x1xf32> to vector<8x256xf32>
    %44 = arith.addf %41, %43 : vector<8x256xf32>
    %cst_34 = arith.constant 0.000000e+00 : f32
    %45 = vector.broadcast %cst_34 : f32 to vector<8x256xf32>
    %46 = arith.maximumf %44, %45 : vector<8x256xf32>
    %c0_35 = arith.constant 0 : index
    %c0_36 = arith.constant 0 : index
    %47 = vector.load %arg4[%c0_35, %c0_36] : memref<8x256xf32, #tpu.memory_space<vmem>>, vector<8x256xf32>
    tpu.vector_store %arg4[%c0_35, %c0_36], %46 {strides = array<i32>} : memref<8x256xf32, #tpu.memory_space<vmem>>, vector<8x256xf32>,
    return
  }
  func.func @transform_0(%arg0: i32) -> (i32, i32) {
    %c0_i32 = arith.constant 0 : i32
    %c0_i32_0 = arith.constant 0 : i32
    return %c0_i32, %arg0 : i32, i32
  }
  func.func @transform_1(%arg0: i32) -> (i32, i32) {
    %c0_i32 = arith.constant 0 : i32
    %c0_i32_0 = arith.constant 0 : i32
    %c0_i32_1 = arith.constant 0 : i32
    return %c0_i32, %c0_i32_0 : i32, i32
  }
  func.func @transform_2(%arg0: i32) -> (i32, i32) {
    %c0_i32 = arith.constant 0 : i32
    %c0_i32_0 = arith.constant 0 : i32
    %c0_i32_1 = arith.constant 0 : i32
    return %c0_i32, %c0_i32_0 : i32, i32
  }
  func.func @transform_3(%arg0: i32) -> (i32, i32) {
    %c0_i32 = arith.constant 0 : i32
    %c0_i32_0 = arith.constant 0 : i32
    return %c0_i32, %arg0 : i32, i32
  }
}

</mosaic_0001>

<llo_original>
// kernel: tpu_custom_call.1
$region0: #{tpu_custom_call.1}
  #allocation0 [shape = 'u32[]', space=smem, size = 0x4, offset = 0x4, fixed_abs, tag = 'smem constant byte address 0x4 - core index']
  #allocation1 [shape = 'u32[144,128]{1,0:T(1,128)}', space=vmem, size = 0x12000, scoped, tag = 'internal scratch']
  #allocation2 [shape = 'f32[16,256]{1,0:T(8,128)}', space=vmem, size = 0x4000, scoped, tag = 'scratch operand']
  %s0 = inlined_call_operand.vmem [shape: bf16[4,512], index: 0, kind: input, shape index: {}]
  %s1 = inlined_call_operand.vmem [shape: bf16[40,16], index: 1, kind: input, shape index: {}]
  %s2 = inlined_call_operand.vmem [shape: f32[8,5], index: 2, kind: input, shape index: {}]
  %s3 = inlined_call_operand.hbm [shape: f32[8,512], index: 3, kind: output, shape index: {}]
  %s4 = sld [smem:[#allocation0]]
  $region45: #{tpu_custom_call.1} parent=0
    _
  %s6 = ssub.s32 1, %s4
  %s7 = scalar_select 0, %s6, %s4
  $region1: #{tpu_custom_call.1} parent=0
    #allocation3 [shape = 'u8[16384]{0}', space=vmem, size = 0x4000, scoped, tag = 'output window, operand 0']
    #allocation4 [shape = 's32[2]{0}', space=sflag, size = 0x8, scoped, tag = 'scoped memory for tpu_custom_call.1']
    %8 = vsyncpa [#allocation4], 0
    %s9 = scalar_lea.sflag [#allocation4], 1
    %10 = vsyncpa %s9, 0
    loop: start=0, step=1, limit=4
    $region2: #{tpu_custom_call.1} parent=1 // loop_pre_header
      _
    $region3: #{tpu_custom_call.1} parent=1 // loop_header
      %s12 = sphi 0, %s16
      %p13 = scmp.ge.s32.totalorder %s12, 4
      %s22 = sphi 0, %s24
      %s25 = sphi 0, %s22
      %s26 = sphi 0, %s25
      %s42 = sphi 0, %s26
      %s46 = sphi 0, %s46
      %s48 = sphi 0, %s46
      %s49 = sphi 0, %s48
      %s63 = sphi 0, %s49
      %s67 = sphi 0, %s67
      %s69 = sphi 0, %s67
      %s70 = sphi 0, %s69
      %s84 = sphi 0, %s70
      %s90 = sphi 0, %s92
      %s93 = sphi 0, %s90
      %s94 = sphi 0, %s93
      %s110 = sphi 0, %s94
    $region4: #{tpu_custom_call.1} parent=1 // loop_header_branch
      %15 = sbr.rel (%p13) target = $region8
    $region5: #{tpu_custom_call.1} parent=1 // loop_body
      %s17 = ssub.s32 %s12, 1
      %s18 = ssub.s32 %s12, 2
      %s19 = sadd.s32 %s12, 1
      %s20 = ssub.s32 %s12, %s19
      %p21 = scmp.eq.s32.totalorder %s20, 0
      %s23 = sadd.s32 %s22, 1
      %s24 = scalar_select %p21, %s22, %s23
      %p27 = pneg %p21
      %p28 = scmp.eq.s32.totalorder %s12, 1
      %p29 = por %p27, %p28
      %p30 = scmp.ne.s32.totalorder %s22, %s25
      %p31 = scmp.eq.s32.totalorder %s12, 0
      %p32 = por %p30, %p31
      %p33 = scmp.ne.s32.totalorder %s22, %s25
      %p34 = scmp.eq.s32.totalorder %s17, 1
      %p35 = por %p33, %p34
      %p36 = scmp.ne.s32.totalorder %s25, %s26
      %p37 = scmp.eq.s32.totalorder %s17, 0
      %p38 = por %p36, %p37
      %p39 = scmp.ne.s32.totalorder %s25, %s26
      %p40 = scmp.eq.s32.totalorder %s18, 1
      %p41 = por %p39, %p40
      %p43 = scmp.ne.s32.totalorder %s26, %s42
      %p44 = scmp.eq.s32.totalorder %s18, 0
      %p45 = por %p43, %p44
      %s47 = sadd.s32 %s46, 1
      %p50 = scmp.eq.s32.totalorder %s12, 1
      %p51 = scmp.ne.s32.totalorder %s46, %s48
      %p52 = scmp.eq.s32.totalorder %s12, 0
      %p53 = por %p51, %p52
      %p54 = scmp.ne.s32.totalorder %s46, %s48
      %p55 = scmp.eq.s32.totalorder %s17, 1
      %p56 = por %p54, %p55
      %p57 = scmp.ne.s32.totalorder %s48, %s49
      %p58 = scmp.eq.s32.totalorder %s17, 0
      %p59 = por %p57, %p58
      %p60 = scmp.ne.s32.totalorder %s48, %s49
      %p61 = scmp.eq.s32.totalorder %s18, 1
      %p62 = por %p60, %p61
      %p64 = scmp.ne.s32.totalorder %s49, %s63
      %p65 = scmp.eq.s32.totalorder %s18, 0
      %p66 = por %p64, %p65
      %s68 = sadd.s32 %s67, 1
      %p71 = scmp.eq.s32.totalorder %s12, 1
      %p72 = scmp.ne.s32.totalorder %s67, %s69
      %p73 = scmp.eq.s32.totalorder %s12, 0
      %p74 = por %p72, %p73
      %p75 = scmp.ne.s32.totalorder %s67, %s69
      %p76 = scmp.eq.s32.totalorder %s17, 1
      %p77 = por %p75, %p76
      %p78 = scmp.ne.s32.totalorder %s69, %s70
      %p79 = scmp.eq.s32.totalorder %s17, 0
      %p80 = por %p78, %p79
      %p81 = scmp.ne.s32.totalorder %s69, %s70
      %p82 = scmp.eq.s32.totalorder %s18, 1
      %p83 = por %p81, %p82
      %p85 = scmp.ne.s32.totalorder %s70, %s84
      %p86 = scmp.eq.s32.totalorder %s18, 0
      %p87 = por %p85, %p86
      %s88 = ssub.s32 %s12, %s19
      %p89 = scmp.eq.s32.totalorder %s88, 0
      %s91 = sadd.s32 %s90, 1
      %s92 = scalar_select %p89, %s90, %s91
      %p95 = pneg %p89
      %p96 = scmp.eq.s32.totalorder %s12, 1
      %p97 = por %p95, %p96
      %p98 = scmp.ne.s32.totalorder %s90, %s93
      %p99 = scmp.eq.s32.totalorder %s12, 0
      %p100 = por %p98, %p99
      %p101 = scmp.ne.s32.totalorder %s90, %s93
      %p102 = scmp.eq.s32.totalorder %s17, 1
      %p103 = por %p101, %p102
      %p104 = scmp.ne.s32.totalorder %s93, %s94
      %p105 = scmp.eq.s32.totalorder %s17, 0
      %p106 = por %p104, %p105
      %p107 = scmp.ne.s32.totalorder %s93, %s94
      %p108 = scmp.eq.s32.totalorder %s18, 1
      %p109 = por %p107, %p108
      %p111 = scmp.ne.s32.totalorder %s94, %s110
      %p112 = scmp.eq.s32.totalorder %s18, 0
      %p113 = por %p111, %p112
      %p114 = scmp.le.s32.totalorder 1, %s12
      %p115 = scmp.lt.s32.totalorder %s12, 3
      %p116 = pnand %p114, %p115
      %p117 = pneg %p116
      // Predicated region
      $region9: #{tpu_custom_call.1} parent=5 // pred_check
        _
      $region10: #{tpu_custom_call.1} parent=5 // pred_check_branch
        %119 = sbr.rel (%p116) target = $region12
      $region11: #{tpu_custom_call.1} parent=5 // pred_region
        %s120 = ssub.s32 %s12, 1
        // Predicated region
        $region13: #{tpu_custom_call.1} parent=11 // pred_check
          %p121 = pneg %p59
        $region14: #{tpu_custom_call.1} parent=11 // pred_check_branch
          %123 = sbr.rel (%p121) target = $region16
        $region15: #{tpu_custom_call.1} parent=11 // pred_region
          _
        $region16: #{tpu_custom_call.1} parent=11 // pred_fallthru
          _
        // Predicated region
        $region17: #{tpu_custom_call.1} parent=11 // pred_check
          %p124 = pneg %p80
        $region18: #{tpu_custom_call.1} parent=11 // pred_check_branch
          %126 = sbr.rel (%p124) target = $region20
        $region19: #{tpu_custom_call.1} parent=11 // pred_region
          _
        $region20: #{tpu_custom_call.1} parent=11 // pred_fallthru
          _
      $region12: #{tpu_custom_call.1} parent=5 // pred_fallthru
        _
      %p127 = scmp.lt.s32.totalorder %s12, 2
      // Predicated region
      $region21: #{tpu_custom_call.1} parent=5 // pred_check
        %p128 = pneg %p127
      $region22: #{tpu_custom_call.1} parent=5 // pred_check_branch
        %130 = sbr.rel (%p128) target = $region24
      $region23: #{tpu_custom_call.1} parent=5 // pred_region
        // Predicated region
        $region25: #{tpu_custom_call.1} parent=23 // pred_check
          %p131 = pneg %p32
        $region26: #{tpu_custom_call.1} parent=23 // pred_check_branch
          %133 = sbr.rel (%p131) target = $region28
        $region27: #{tpu_custom_call.1} parent=23 // pred_region
          %s134 = smul.u32 2, %s12
          %p135 = scmp.lt.s32.totalorder %s134, 3
          %s136 = scalar_select %p135, %s134, 3
          %s137 = smul.addr %s136, 2
          %s138 = scalar_lea.vmem %s0, %s137
          %s139 = smul.u32 2, %s12
        $region28: #{tpu_custom_call.1} parent=23 // pred_fallthru
          _
      $region24: #{tpu_custom_call.1} parent=5 // pred_fallthru
        _
      %p140 = scmp.le.s32.totalorder 1, %s12
      %p141 = scmp.lt.s32.totalorder %s12, 3
      %p142 = pnand %p140, %p141
      %p143 = pneg %p142
      // Predicated region
      $region29: #{tpu_custom_call.1} parent=5 // pred_check
        _
      $region30: #{tpu_custom_call.1} parent=5 // pred_check_branch
        %145 = sbr.rel (%p142) target = $region32
      $region31: #{tpu_custom_call.1} parent=5 // pred_region
        %s146 = ssub.s32 %s12, 1
        %s147 = smul.u32 2, %s17
        %p148 = scmp.lt.s32.totalorder %s147, 3
        %s149 = scalar_select %p148, %s147, 3
        %s150 = smul.addr %s149, 2
        %s151 = scalar_lea.vmem %s0, %s150
        %p152 = pneg %p38
        %p153 = pneg %p35
        %p154 = pneg %p59
        %p155 = pneg %p56
        %p156 = pneg %p80
        %p157 = pneg %p77
        %p158 = pneg %p106
        %p159 = pneg %p103
        %s160 = sand.u32 %s93, 1
        %s161 = scalar_lea.sflag [#allocation4], %s160
        %s162 = sand.u32 %s93, 1
        %s163 = smul.addr %s162, 16
        %s164 = scalar_lea.vmem [#allocation3], %s163
        %s165 = smul.u32 2, %s17
        %p166 = scmp.lt.s32.totalorder %s165, 3
        %s167 = scalar_select %p166, %s165, 3
        %s168 = smul.addr %s167, 2
        %s169 = scalar_lea.vmem %s0, %s168
        %s170 = smul.u32 2, %s17
        %s171 = smul.u32 2, %s17
        %v173 = vld [vmem:[%s169] sm:$0xf]
        %v174 = vld [vmem:[%s1] sm:$0x3]
        %v175 = vld [vmem:[%s2] sm:$0xf]
        %177 = vset.pattern.permute.xlu0 0
        %178 = vperm.xlu0 %177, %v175
        %v179 = vpop.permute.xlu0 %178
        %v183 = vunpack.c.l.s4 1983009808
        %v184 = vunpack.c.0.s8 %v183
        %v185 = vlaneseq
        %v186 = vshrl.u32 %v185, 7
        %v187 = vsub.s32 %v184, %v186
        %v188 = vrot.slane %v173, %v187
        %v189 = vcombine.high %v188, %v188
        %vm190 = vcmask 31744
        %v192 = vsel %vm190, %v174, 0
        %vm194 = vcmask 1041408
        %v196 = vsel %vm194, %v188, 0
        %v199 = vsel %vm194, %v189, 0
        %201 = vmatprep.subr.bf16.mxu0 %v199
        %202 = vmatpush1.bf16.msra.mxu0 %v196
        %203 = vmatprep.subr.bf16.mxu0 0
        %204 = vmatpush1.bf16.msra.mxu0 0
        %205 = vmatprep.subr.bf16.mxu0 0
        %206 = vmatpush1.bf16.msra.mxu0 0
        %207 = vmatprep.subr.bf16.mxu0 0
        %208 = vmatpush1.bf16.msra.mxu0 0
        %209 = vmatprep.subr.bf16.mxu0 0
        %210 = vmatpush1.bf16.msra.mxu0 0
        %211 = vmatprep.subr.bf16.mxu0 0
        %212 = vmatpush1.bf16.msra.mxu0 0
        %213 = vmatprep.subr.bf16.mxu0 0
        %214 = vmatpush1.bf16.msra.mxu0 0
        %215 = vmatprep.subr.bf16.mxu0 0
        %216 = vmatpush1.bf16.msra.mxu0 0
        %217 = vmatprep.subr.bf16.mxu0 0
        %218 = vmatpush1.bf16.msra.mxu0 0
        %219 = vmatprep.subr.bf16.mxu0 0
        %220 = vmatpush1.bf16.msra.mxu0 0
        %221 = vmatprep.subr.bf16.mxu0 0
        %222 = vmatpush1.bf16.msra.mxu0 0
        %223 = vmatprep.subr.bf16.mxu0 0
        %224 = vmatpush1.bf16.msra.mxu0 0
        %225 = vmatprep.subr.bf16.mxu0 0
        %226 = vmatpush1.bf16.msra.mxu0 0
        %227 = vmatprep.subr.bf16.mxu0 0
        %228 = vmatpush1.bf16.msra.mxu0 0
        %229 = vmatprep.subr.bf16.mxu0 0
        %230 = vmatpush1.bf16.msra.mxu0 0
        %231 = vmatprep.subr.bf16.mxu0 0
        %232 = vmatpush1.bf16.msra.mxu0 0
        %233 = vmatprep.mubr.bf16.mxu0 0
        %234 = vmatmul.mubr.bf16.gmra.mrb[0].mxu0 %v192
        %v235 = vpop.f32.mrb[0].mxu0
        %v236 = vadd.f32 %v179, %v235
        %v237 = vpop.f32.mrb[0].mxu0
        %v238 = vadd.f32 %v179, %v237
        %v239 = vpop.f32.mrb[0].mxu0
        %v240 = vpop.f32.mrb[0].mxu0
        %241 = vdwg.mxu0
        %v242 = vmax.f32 %v236, 0.0
        %v243 = vmax.f32 %v238, 0.0
        %v244 = vpack.c.bf16 %v242, %v242
        %v245 = vpack.c.bf16 %v243, %v243
        %v246 = vld [vmem:[%s1 + $0x4] sm:$0x3]
        %v247 = vld [vmem:[%s2] sm:$0xf]
        %249 = vset.pattern.permute.xlu0 1
        %250 = vperm.xlu0 %249, %v247
        %v251 = vpop.permute.xlu0 %250
        %v254 = vsel %vm190, %v246, 0
        %v257 = vsel %vm194, %v244, 0
        %v260 = vsel %vm194, %v245, 0
        %262 = vmatprep.subr.bf16.mxu0 %v260
        %263 = vmatpush1.bf16.msra.mxu0 %v257
        %264 = vmatprep.subr.bf16.mxu0 0
        %265 = vmatpush1.bf16.msra.mxu0 0
        %266 = vmatprep.subr.bf16.mxu0 0
        %267 = vmatpush1.bf16.msra.mxu0 0
        %268 = vmatprep.subr.bf16.mxu0 0
        %269 = vmatpush1.bf16.msra.mxu0 0
        %270 = vmatprep.subr.bf16.mxu0 0
        %271 = vmatpush1.bf16.msra.mxu0 0
        %272 = vmatprep.subr.bf16.mxu0 0
        %273 = vmatpush1.bf16.msra.mxu0 0
        %274 = vmatprep.subr.bf16.mxu0 0
        %275 = vmatpush1.bf16.msra.mxu0 0
        %276 = vmatprep.subr.bf16.mxu0 0
        %277 = vmatpush1.bf16.msra.mxu0 0
        %278 = vmatprep.subr.bf16.mxu0 0
        %279 = vmatpush1.bf16.msra.mxu0 0
        %280 = vmatprep.subr.bf16.mxu0 0
        %281 = vmatpush1.bf16.msra.mxu0 0
        %282 = vmatprep.subr.bf16.mxu0 0
        %283 = vmatpush1.bf16.msra.mxu0 0
        %284 = vmatprep.subr.bf16.mxu0 0
        %285 = vmatpush1.bf16.msra.mxu0 0
        %286 = vmatprep.subr.bf16.mxu0 0
        %287 = vmatpush1.bf16.msra.mxu0 0
        %288 = vmatprep.subr.bf16.mxu0 0
        %289 = vmatpush1.bf16.msra.mxu0 0
        %290 = vmatprep.subr.bf16.mxu0 0
        %291 = vmatpush1.bf16.msra.mxu0 0
        %292 = vmatprep.subr.bf16.mxu0 0
        %293 = vmatpush1.bf16.msra.mxu0 0
        %294 = vmatprep.mubr.bf16.mxu0 0
        %295 = vmatmul.mubr.bf16.gmra.mrb[0].mxu0 %v254
        %v296 = vpop.f32.mrb[0].mxu0
        %v297 = vadd.f32 %v251, %v296
        %v298 = vpop.f32.mrb[0].mxu0
        %v299 = vadd.f32 %v251, %v298
        %v300 = vpop.f32.mrb[0].mxu0
        %v301 = vpop.f32.mrb[0].mxu0
        %302 = vdwg.mxu0
        %v303 = vmax.f32 %v297, 0.0
        %v304 = vmax.f32 %v299, 0.0
        %305 = vst [vmem:[#allocation2] sm:$0xf] %v303
        %306 = vst [vmem:[#allocation2 + $0x8] sm:$0xf] %v304
        %v309 = vrot.slane %v242, 4
        %v310 = vrot.slane %v243, 4
        %313 = vst [vmem:[#allocation2] sm:$0xf0] %v309
        %314 = vst [vmem:[#allocation2 + $0x8] sm:$0xf0] %v310
        %v315 = vld [vmem:[#allocation2] sm:$0xff]
        %v316 = vld [vmem:[#allocation2 + $0x8] sm:$0xff]
        %v317 = vpack.c.bf16 %v315, %v315
        %v318 = vpack.c.bf16 %v316, %v316
        %v319 = vld [vmem:[%s1 + $0x8] sm:$0x3]
        %v320 = vld [vmem:[%s2] sm:$0xf]
        %322 = vset.pattern.permute.xlu0 2
        %323 = vperm.xlu0 %322, %v320
        %v324 = vpop.permute.xlu0 %323
        %vm326 = vcmask 64512
        %v328 = vsel %vm326, %v319, 0
        %vm330 = vcmask 1043456
        %v332 = vsel %vm330, %v317, 0
        %v335 = vsel %vm330, %v318, 0
        %337 = vmatprep.subr.bf16.mxu0 %v335
        %338 = vmatpush1.bf16.msra.mxu0 %v332
        %339 = vmatprep.subr.bf16.mxu0 0
        %340 = vmatpush1.bf16.msra.mxu0 0
        %341 = vmatprep.subr.bf16.mxu0 0
        %342 = vmatpush1.bf16.msra.mxu0 0
        %343 = vmatprep.subr.bf16.mxu0 0
        %344 = vmatpush1.bf16.msra.mxu0 0
        %345 = vmatprep.subr.bf16.mxu0 0
        %346 = vmatpush1.bf16.msra.mxu0 0
        %347 = vmatprep.subr.bf16.mxu0 0
        %348 = vmatpush1.bf16.msra.mxu0 0
        %349 = vmatprep.subr.bf16.mxu0 0
        %350 = vmatpush1.bf16.msra.mxu0 0
        %351 = vmatprep.subr.bf16.mxu0 0
        %352 = vmatpush1.bf16.msra.mxu0 0
        %353 = vmatprep.subr.bf16.mxu0 0
        %354 = vmatpush1.bf16.msra.mxu0 0
        %355 = vmatprep.subr.bf16.mxu0 0
        %356 = vmatpush1.bf16.msra.mxu0 0
        %357 = vmatprep.subr.bf16.mxu0 0
        %358 = vmatpush1.bf16.msra.mxu0 0
        %359 = vmatprep.subr.bf16.mxu0 0
        %360 = vmatpush1.bf16.msra.mxu0 0
        %361 = vmatprep.subr.bf16.mxu0 0
        %362 = vmatpush1.bf16.msra.mxu0 0
        %363 = vmatprep.subr.bf16.mxu0 0
        %364 = vmatpush1.bf16.msra.mxu0 0
        %365 = vmatprep.subr.bf16.mxu0 0
        %366 = vmatpush1.bf16.msra.mxu0 0
        %367 = vmatprep.subr.bf16.mxu0 0
        %368 = vmatpush1.bf16.msra.mxu0 0
        %369 = vmatprep.mubr.bf16.mxu0 0
        %370 = vmatmul.mubr.bf16.gmra.mrb[0].mxu0 %v328
        %v371 = vpop.f32.mrb[0].mxu0
        %v372 = vadd.f32 %v324, %v371
        %v373 = vpop.f32.mrb[0].mxu0
        %v374 = vadd.f32 %v324, %v373
        %v375 = vpop.f32.mrb[0].mxu0
        %v376 = vpop.f32.mrb[0].mxu0
        %377 = vdwg.mxu0
        %v378 = vmax.f32 %v372, 0.0
        %v379 = vmax.f32 %v374, 0.0
        %380 = vst [vmem:[#allocation2 + $0x10] sm:$0xf] %v378
        %381 = vst [vmem:[#allocation2 + $0x18] sm:$0xf] %v379
        %v382 = vld [vmem:[#allocation2] sm:$0xff]
        %v383 = vld [vmem:[#allocation2 + $0x8] sm:$0xff]
        %v384 = vld [vmem:[#allocation2 + $0x10] sm:$0xf]
        %v385 = vld [vmem:[#allocation2 + $0x18] sm:$0xf]
        %v386 = vpack.c.bf16 %v384, %v382
        %v387 = vpack.c.bf16 %v385, %v383
        %v388 = vld [vmem:[%s1 + $0xc] sm:$0x3]
        %v389 = vld [vmem:[%s2] sm:$0xf]
        %391 = vset.pattern.permute.xlu0 3
        %392 = vperm.xlu0 %391, %v389
        %v393 = vpop.permute.xlu0 %392
        %vm395 = vcmask 97280
        %v397 = vsel %vm395, %v388, 0
        %vm399 = vcmask 1045504
        %v401 = vsel %vm399, %v386, 0
        %v404 = vsel %vm399, %v387, 0
        %406 = vmatprep.subr.bf16.mxu0 %v404
        %407 = vmatpush1.bf16.msra.mxu0 %v401
        %408 = vmatprep.subr.bf16.mxu0 0
        %409 = vmatpush1.bf16.msra.mxu0 0
        %410 = vmatprep.subr.bf16.mxu0 0
        %411 = vmatpush1.bf16.msra.mxu0 0
        %412 = vmatprep.subr.bf16.mxu0 0
        %413 = vmatpush1.bf16.msra.mxu0 0
        %414 = vmatprep.subr.bf16.mxu0 0
        %415 = vmatpush1.bf16.msra.mxu0 0
        %416 = vmatprep.subr.bf16.mxu0 0
        %417 = vmatpush1.bf16.msra.mxu0 0
        %418 = vmatprep.subr.bf16.mxu0 0
        %419 = vmatpush1.bf16.msra.mxu0 0
        %420 = vmatprep.subr.bf16.mxu0 0
        %421 = vmatpush1.bf16.msra.mxu0 0
        %422 = vmatprep.subr.bf16.mxu0 0
        %423 = vmatpush1.bf16.msra.mxu0 0
        %424 = vmatprep.subr.bf16.mxu0 0
        %425 = vmatpush1.bf16.msra.mxu0 0
        %426 = vmatprep.subr.bf16.mxu0 0
        %427 = vmatpush1.bf16.msra.mxu0 0
        %428 = vmatprep.subr.bf16.mxu0 0
        %429 = vmatpush1.bf16.msra.mxu0 0
        %430 = vmatprep.subr.bf16.mxu0 0
        %431 = vmatpush1.bf16.msra.mxu0 0
        %432 = vmatprep.subr.bf16.mxu0 0
        %433 = vmatpush1.bf16.msra.mxu0 0
        %434 = vmatprep.subr.bf16.mxu0 0
        %435 = vmatpush1.bf16.msra.mxu0 0
        %436 = vmatprep.subr.bf16.mxu0 0
        %437 = vmatpush1.bf16.msra.mxu0 0
        %438 = vmatprep.mubr.bf16.mxu0 0
        %439 = vmatmul.mubr.bf16.gmra.mrb[0].mxu0 %v397
        %v440 = vpop.f32.mrb[0].mxu0
        %v441 = vadd.f32 %v393, %v440
        %v442 = vpop.f32.mrb[0].mxu0
        %v443 = vadd.f32 %v393, %v442
        %v444 = vpop.f32.mrb[0].mxu0
        %v445 = vpop.f32.mrb[0].mxu0
        %446 = vdwg.mxu0
        %v447 = vmax.f32 %v441, 0.0
        %v448 = vmax.f32 %v443, 0.0
        %v451 = vrot.slane %v447, 4
        %v452 = vrot.slane %v448, 4
        %455 = vst [vmem:[#allocation2 + $0x10] sm:$0xf0] %v451
        %456 = vst [vmem:[#allocation2 + $0x18] sm:$0xf0] %v452
        %v457 = vld [vmem:[#allocation2] sm:$0xff]
        %v458 = vld [vmem:[#allocation2 + $0x8] sm:$0xff]
        %v459 = vld [vmem:[#allocation2 + $0x10] sm:$0xff]
        %v460 = vld [vmem:[#allocation2 + $0x18] sm:$0xff]
        %v461 = vpack.c.bf16 %v459, %v457
        %v462 = vpack.c.bf16 %v460, %v458
        %v463 = vld [vmem:[%s1 + $0x10] sm:$0xf]
        %v464 = vld [vmem:[%s2] sm:$0xff]
        %466 = vset.pattern.permute.xlu0 4
        %467 = vperm.xlu0 %466, %v464
        %v468 = vpop.permute.xlu0 %467
        %vm470 = vcmask 130048
        %v472 = vsel %vm470, %v463, 0
        %474 = vmatprep.subr.bf16.mxu0 %v462
        %475 = vmatpush1.bf16.msra.mxu0 %v461
        %476 = vmatprep.subr.bf16.mxu0 0
        %477 = vmatpush1.bf16.msra.mxu0 0
        %478 = vmatprep.subr.bf16.mxu0 0
        %479 = vmatpush1.bf16.msra.mxu0 0
        %480 = vmatprep.subr.bf16.mxu0 0
        %481 = vmatpush1.bf16.msra.mxu0 0
        %482 = vmatprep.subr.bf16.mxu0 0
        %483 = vmatpush1.bf16.msra.mxu0 0
        %484 = vmatprep.subr.bf16.mxu0 0
        %485 = vmatpush1.bf16.msra.mxu0 0
        %486 = vmatprep.subr.bf16.mxu0 0
        %487 = vmatpush1.bf16.msra.mxu0 0
        %488 = vmatprep.subr.bf16.mxu0 0
        %489 = vmatpush1.bf16.msra.mxu0 0
        %490 = vmatprep.subr.bf16.mxu0 0
        %491 = vmatpush1.bf16.msra.mxu0 0
        %492 = vmatprep.subr.bf16.mxu0 0
        %493 = vmatpush1.bf16.msra.mxu0 0
        %494 = vmatprep.subr.bf16.mxu0 0
        %495 = vmatpush1.bf16.msra.mxu0 0
        %496 = vmatprep.subr.bf16.mxu0 0
        %497 = vmatpush1.bf16.msra.mxu0 0
        %498 = vmatprep.subr.bf16.mxu0 0
        %499 = vmatpush1.bf16.msra.mxu0 0
        %500 = vmatprep.subr.bf16.mxu0 0
        %501 = vmatpush1.bf16.msra.mxu0 0
        %502 = vmatprep.subr.bf16.mxu0 0
        %503 = vmatpush1.bf16.msra.mxu0 0
        %504 = vmatprep.subr.bf16.mxu0 0
        %505 = vmatpush1.bf16.msra.mxu0 0
        %506 = vmatprep.mubr.bf16.mxu0 0
        %507 = vmatmul.mubr.bf16.gmra.mrb[0].mxu0 %v472
        %v508 = vpop.f32.mrb[0].mxu0
        %v509 = vadd.f32 %v468, %v508
        %v510 = vpop.f32.mrb[0].mxu0
        %v511 = vadd.f32 %v468, %v510
        %v512 = vpop.f32.mrb[0].mxu0
        %v513 = vpop.f32.mrb[0].mxu0
        %514 = vdwg.mxu0
        %v515 = vmax.f32 %v509, 0.0
        %v516 = vmax.f32 %v511, 0.0
        %517 = vst [vmem:[%s164] sm:$0xff] %v515
        %518 = vst [vmem:[%s164 + $0x8] sm:$0xff] %v516
        %s519 = sand.u32 %s93, 1
        %s520 = scalar_lea.sflag [#allocation4], %s519
        %s521 = sand.u32 %s93, 1
        %s522 = smul.addr %s521, 16
        %s523 = scalar_lea.vmem [#allocation3], %s522
        // Predicated region
        $region33: #{tpu_custom_call.1} parent=31 // pred_check
          %p524 = pneg %p103
        $region34: #{tpu_custom_call.1} parent=31 // pred_check_branch
          %526 = sbr.rel (%p524) target = $region36
        $region35: #{tpu_custom_call.1} parent=31 // pred_region
          %s527 = smul.u32 2, %s17
          %s529 = ssub.s32 256, 256
          %530 = vsyncadd %s520, %s529
          %s531 = smul.addr %s527, 128
          %s532 = scalar_lea.hbm %s3, %s531
          %s534 = sshll.u32 %s523, 4
          %s535 = int_to_ptr.vmem [resolvable:$true] %s534
          %537 = dma.vmem_to_hbm [thread:$0]  %s535, 256, %s532, %s520
        $region36: #{tpu_custom_call.1} parent=31 // pred_fallthru
          _
      $region32: #{tpu_custom_call.1} parent=5 // pred_fallthru
        _
      %p538 = scmp.le.s32.totalorder 2, %s12
      // Predicated region
      $region37: #{tpu_custom_call.1} parent=5 // pred_check
        %p539 = pneg %p538
      $region38: #{tpu_custom_call.1} parent=5 // pred_check_branch
        %541 = sbr.rel (%p539) target = $region40
      $region39: #{tpu_custom_call.1} parent=5 // pred_region
        %s542 = ssub.s32 %s12, 2
        // Predicated region
        $region41: #{tpu_custom_call.1} parent=39 // pred_check
          %p543 = pneg %p109
        $region42: #{tpu_custom_call.1} parent=39 // pred_check_branch
          %545 = sbr.rel (%p543) target = $region44
        $region43: #{tpu_custom_call.1} parent=39 // pred_region
          %s546 = sand.u32 %s94, 1
          %s547 = scalar_lea.sflag [#allocation4], %s546
          %s548 = sand.u32 %s94, 1
          %s549 = smul.addr %s548, 16
          %s550 = scalar_lea.vmem [#allocation3], %s549
          %551 = dma.done %s547, 256
        $region44: #{tpu_custom_call.1} parent=39 // pred_fallthru
          _
      $region40: #{tpu_custom_call.1} parent=5 // pred_fallthru
        _
    $region6: #{tpu_custom_call.1} parent=1 // loop_footer
      %s16 = sadd.s32 1, %s12
    $region7: #{tpu_custom_call.1} parent=1 // loop_footer_branch
      %11 = sbr.rel target = $region3
    $region8: #{tpu_custom_call.1} parent=1 // loop_exit
      _
    %552 = vsyncpa [#allocation4], 1
    %s553 = scalar_lea.sflag [#allocation4], 1
    %554 = vsyncpa %s553, 1

</llo_original>
